<compile_context>
chip_gen: v7x
topology: tpu7x:2x2x1
jax: 0.10.0
libtpu: 0.0.40
codegen_flags: <defaults>
</compile_context>

<pallas_src>
import math
from functools import partial

import jax
import jax.numpy as jnp
from jax.experimental import pallas as pl
from jax.experimental.pallas import tpu as pltpu


# ---------------------------------------------------------------------------
# Fused kernel: QKV projection + multi-head attention + out-proj + residual+LN
# ---------------------------------------------------------------------------
def _mha_fused_kernel(x_ref, wqkv_ref, bqkv_ref, wo_ref, bo_ref, gamma_ref,
                      beta_ref, o_ref, *, batch, seq, num_heads, depth_qk,
                      depth_v, eps):
    B, S, H, dqk, dv = batch, seq, num_heads, depth_qk, depth_v
    hdqk, hdv = H * dqk, H * dv
    R = B * S
    E = x_ref.shape[1]
    cdtype = x_ref.dtype          # matmul-input dtype (f32, or bf16 on v6e/v7x)

    x = x_ref[...]                                                    # (R, E)
    x_f32 = x.astype(jnp.float32)                                     # residual

    # ---- fused QKV projection: one MXU pass over all B*S rows, 2*hdqk+hdv
    #      output columns. 1/sqrt(dqk) already folded into the Q columns.
    qkv = jnp.dot(x, wqkv_ref[...], preferred_element_type=jnp.float32)
    qkv = qkv + bqkv_ref[...]                                         # f32

    wo = wo_ref[...]                                                  # (hdv, E)
    y = jnp.zeros((R, E), jnp.float32)                                # out-proj acc

    # ---- per-head attention, batched over the B batches of this block.
    # H is small & static here; each head's contribution to the final linear is
    # accumulated directly (== concat(heads) @ W_o) so no concat buffer exists.
    for h in range(H):
        q = qkv[:, h * dqk:(h + 1) * dqk].reshape(B, S, dqk).astype(cdtype)
        k = qkv[:, hdqk + h * dqk: hdqk + (h + 1) * dqk] \
            .reshape(B, S, dqk).astype(cdtype)
        v = qkv[:, 2 * hdqk + h * dv: 2 * hdqk + (h + 1) * dv] \
            .reshape(B, S, dv).astype(cdtype)

        # QK^T: contract last axes directly on the MXU (no K transpose).
        s = jax.lax.dot_general(q, k, (((2,), (2,)), ((0,), (0,))),
                                preferred_element_type=jnp.float32)   # (B,S,S)
        m = jnp.max(s, axis=-1, keepdims=True)
        p = jnp.exp(s - m)
        l = jnp.sum(p, axis=-1, keepdims=True)
        pv = jax.lax.dot_general(p.astype(cdtype), v,
                                 (((2,), (1,)), ((0,), (0,))),
                                 preferred_element_type=jnp.float32)  # (B,S,dv)
        att = (pv / l).reshape(R, dv)         # exact softmax denominator (f32)

        # head-wise slice of W_o rows (sublane-aligned, multiple of 8).
        y = y + jnp.dot(att.astype(cdtype), wo[h * dv:(h + 1) * dv, :],
                        preferred_element_type=jnp.float32)

    # ---- final bias + dropout(identity) + residual + LayerNorm (all f32).
    y = y + bo_ref[...]
    r = x_f32 + y
    mu = jnp.mean(r, axis=-1, keepdims=True)
    var = jnp.mean((r - mu) ** 2, axis=-1, keepdims=True)
    xn = (r - mu) * jax.lax.rsqrt(var + eps)
    o_ref[...] = (xn * gamma_ref[...] + beta_ref[...]).astype(o_ref.dtype)


def mha_forward(x, w_qkv, b_qkv, w_out, b_out, gamma, beta, *, num_heads,
                depth_qk, depth_v, eps=1e-5, compute_dtype=jnp.float32):
    B, S, E = x.shape
    hdqk = num_heads * depth_qk
    hdv = num_heads * depth_v
    P = 2 * hdqk + hdv
    R = B * S

    # Wrapper-side layout plumbing: one flat (B*S, E) slab, matmul inputs cast
    # to the compute dtype (bf16 halves HBM->VMEM bytes on v6e/v7x).
    x2 = x.reshape(R, E).astype(compute_dtype)
    wqkv = w_qkv.astype(compute_dtype)
    wo = w_out.astype(compute_dtype)

    kernel = partial(_mha_fused_kernel, batch=B, seq=S, num_heads=num_heads,
                     depth_qk=depth_qk, depth_v=depth_v, eps=eps)
    full = lambda i: (0, 0)   # every block == the full array, grid has 1 step

    out2 = pl.pallas_call(
        kernel,
        out_shape=jax.ShapeDtypeStruct((R, E), jnp.float32),
        grid=(1,),
        in_specs=[
            pl.BlockSpec((R, E), full),       # x (flattened rows)
            pl.BlockSpec((E, P), full),       # fused w_qkv (scale folded in Q)
            pl.BlockSpec((1, P), full),       # fused b_qkv (scale folded in Q)
            pl.BlockSpec((hdv, E), full),     # w_out
            pl.BlockSpec((1, E), full),       # b_out
            pl.BlockSpec((1, E), full),       # gamma
            pl.BlockSpec((1, E), full),       # beta
        ],
        out_specs=pl.BlockSpec((R, E), full),
        compiler_params=pltpu.CompilerParams(
            dimension_semantics=("arbitrary",),
            vmem_limit_bytes=32 * 1024 * 1024),
    )(x2, wqkv, b_qkv.reshape(1, P).astype(jnp.float32),
      wo, b_out.reshape(1, E).astype(jnp.float32),
      gamma.reshape(1, E).astype(jnp.float32),
      beta.reshape(1, E).astype(jnp.float32))

    return out2.reshape(B, S, E)


# ---------------------------------------------------------------------------
# Module wrapper (parameter setup mirrors the PyTorch module)
# ---------------------------------------------------------------------------
class MultiHeadedAttentionPallas:
    def __init__(self, embedding_size=32, num_heads=2, depth_qk=8, depth_v=8,
                 compute_dtype=jnp.float32, key=jax.random.PRNGKey(42)):
        self.d_model = embedding_size
        self.num_heads = num_heads
        self.depth_qk = depth_qk
        self.depth_v = depth_v
        self.compute_dtype = compute_dtype
        self.proj_depth = (depth_qk + depth_qk + depth_v) * num_heads

        k1, k2, k3, k4 = jax.random.split(key, 4)

        # Conv1d(d_model, proj_depth, kernel=1) == dense (d_model, proj_depth)
        bound_p = 1.0 / math.sqrt(self.d_model)
        self.w_proj = jax.random.uniform(k1, (self.d_model, self.proj_depth),
                                         jnp.float32, -bound_p, bound_p)
        self.b_proj = jax.random.uniform(k2, (self.proj_depth,),
                                         jnp.float32, -bound_p, bound_p)

        # Fused QKV weights for the kernel with the 1/sqrt(depth_qk) attention
        # scale folded into the Q columns (host-side, once).
        hq = depth_qk * num_heads
        hv = depth_v * num_heads
        scale = 1.0 / math.sqrt(depth_qk)
        col_scale = jnp.concatenate([jnp.full((hq,), scale, jnp.float32),
                                     jnp.ones((hq + hv,), jnp.float32)])
        self.w_qkv = self.w_proj * col_scale[None, :]
        self.b_qkv = self.b_proj * col_scale

        # final Linear(depth_v*num_heads -> d_model)
        d_in_o = depth_v * num_heads
        bound_o = 1.0 / math.sqrt(d_in_o)
        self.w_out = jax.random.uniform(k3, (d_in_o, self.d_model),
                                        jnp.float32, -bound_o, bound_o)
        self.b_out = jax.random.uniform(k4, (self.d_model,),
                                        jnp.float32, -bound_o, bound_o)

        # LayerNorm(d_model) default init
        self.gamma = jnp.ones((self.d_model,), jnp.float32)
        self.beta = jnp.zeros((self.d_model,), jnp.float32)

    def __call__(self, x):
        return mha_forward(x, self.w_qkv, self.b_qkv, self.w_out, self.b_out,
                           self.gamma, self.beta,
                           num_heads=self.num_heads, depth_qk=self.depth_qk,
                           depth_v=self.depth_v,
                           compute_dtype=self.compute_dtype)


# ---------------------------------------------------------------------------
# Pure-JAX reference (follows the PyTorch flow, unfused/unscaled weights)
# ---------------------------------------------------------------------------
def reference_forward(mha, x, eps=1e-5):
    B, S, E = x.shape
    H, dqk, dv = mha.num_heads, mha.depth_qk, mha.depth_v
    proj = x @ mha.w_proj + mha.b_proj                                 # (B,S,P)
    q, k, v = jnp.split(proj, [dqk * H, 2 * dqk * H], axis=-1)
    sh = lambda t, d: t.reshape(B, S, H, d).transpose(0, 2, 1, 3)      # (B,H,S,d)
    Q, K, V = sh(q, dqk), sh(k, dqk), sh(v, dv)
    s = jnp.einsum('bhqd,bhkd->bhqk', Q, K) / math.sqrt(dqk)
    p = jax.nn.softmax(s, axis=-1)
    att = jnp.einsum('bhqk,bhkd->bhqd', p, V)
    concat = att.transpose(0, 2, 1, 3).reshape(B, S, H * dv)
    y = concat @ mha.w_out + mha.b_out
    r = x + y
    mu = r.mean(-1, keepdims=True)
    var = ((r - mu) ** 2).mean(-1, keepdims=True)
    return (r - mu) / jnp.sqrt(var + eps) * mha.gamma + mha.beta


if __name__ == "__main__":
    key = jax.random.PRNGKey(0)
    k_x, k_p = jax.random.split(key)

    B, S, E = 2, 8, 32          # batch, sequence, embedding
    H, dqk, dv = 2, 8, 8        # heads, depth_qk, depth_v

    x = jax.random.normal(k_x, (B, S, E), dtype=jnp.float32)

    # ---- f32 matmul inputs: exact agreement with the reference.
    mha_f32 = MultiHeadedAttentionPallas(embedding_size=E, num_heads=H,
                                         depth_qk=dqk, depth_v=dv,
                                         compute_dtype=jnp.float32, key=k_p)
    out_f32 = jax.block_until_ready(mha_f32(x))
    ref = reference_forward(mha_f32, x)
    assert out_f32.shape == (B, S, E), out_f32.shape
    assert bool(jnp.all(jnp.isfinite(out_f32)))
    assert bool(jnp.allclose(out_f32, ref, rtol=1e-5, atol=1e-5)), \
        float(jnp.max(jnp.abs(out_f32 - ref)))

    # ---- bf16 matmul inputs (v6e/v7x MXU rec): f32 accumulation and f32
    #      softmax/LayerNorm statistics bound the error; loose tolerance is the
    #      expected bf16 input-rounding effect.
    mha_bf16 = MultiHeadedAttentionPallas(embedding_size=E, num_heads=H,
                                          depth_qk=dqk, depth_v=dv,
                                          compute_dtype=jnp.bfloat16, key=k_p)
    out_bf16 = jax.block_until_ready(mha_bf16(x))
    assert bool(jnp.all(jnp.isfinite(out_bf16)))
    assert bool(jnp.allclose(out_bf16, ref, rtol=5e-2, atol=5e-2)), \
        float(jnp.max(jnp.abs(out_bf16 - ref)))

    print("KERNEL_OK")
</pallas_src>

<mosaic_0001>
module attributes {stable_mosaic.version = 11 : i64} {
  func.func @_mha_fused_kernel(%arg0: i32, %arg1: memref<16x32xf32, #tpu.memory_space<vmem>>, %arg2: memref<32x48xf32, #tpu.memory_space<vmem>>, %arg3: memref<1x48xf32, #tpu.memory_space<vmem>>, %arg4: memref<16x32xf32, #tpu.memory_space<vmem>>, %arg5: memref<1x32xf32, #tpu.memory_space<vmem>>, %arg6: memref<1x32xf32, #tpu.memory_space<vmem>>, %arg7: memref<1x32xf32, #tpu.memory_space<vmem>>, %arg8: memref<16x32xf32, #tpu.memory_space<vmem>>) attributes {dimension_semantics = [#tpu.dimension_semantics<arbitrary>], iteration_bounds = array<i64: 1>, scalar_prefetch = 0 : i64, scratch_operands = 0 : i64, tpu.core_type = #tpu.core_type<tc>, window_params = [{pipeline_mode = #tpu.pipeline_mode<synchronous>, transform_indices = @transform_0, window_bounds = array<i64: 16, 32>}, {pipeline_mode = #tpu.pipeline_mode<synchronous>, transform_indices = @transform_1, window_bounds = array<i64: 32, 48>}, {pipeline_mode = #tpu.pipeline_mode<synchronous>, transform_indices = @transform_2, window_bounds = array<i64: 1, 48>}, {pipeline_mode = #tpu.pipeline_mode<synchronous>, transform_indices = @transform_3, window_bounds = array<i64: 16, 32>}, {pipeline_mode = #tpu.pipeline_mode<synchronous>, transform_indices = @transform_4, window_bounds = array<i64: 1, 32>}, {pipeline_mode = #tpu.pipeline_mode<synchronous>, transform_indices = @transform_5, window_bounds = array<i64: 1, 32>}, {pipeline_mode = #tpu.pipeline_mode<synchronous>, transform_indices = @transform_6, window_bounds = array<i64: 1, 32>}, {pipeline_mode = #tpu.pipeline_mode<synchronous>, transform_indices = @transform_7, window_bounds = array<i64: 16, 32>}]} {
    %c0 = arith.constant 0 : index
    %c0_0 = arith.constant 0 : index
    %0 = vector.load %arg1[%c0, %c0_0] : memref<16x32xf32, #tpu.memory_space<vmem>>, vector<16x32xf32>
    %c0_1 = arith.constant 0 : index
    %c0_2 = arith.constant 0 : index
    %1 = vector.load %arg2[%c0_1, %c0_2] : memref<32x48xf32, #tpu.memory_space<vmem>>, vector<32x48xf32>
    %cst = arith.constant dense<0.000000e+00> : vector<16x48xf32>
    %2 = tpu.matmul %0, %1, %cst {dimension_numbers = #tpu.dot_dimension_numbers<[1], [0], [0], [1], [0, 0, 1, 1], [], []>} : vector<16x32xf32>, vector<32x48xf32>, vector<16x48xf32> -> vector<16x48xf32>
    %c0_3 = arith.constant 0 : index
    %c0_4 = arith.constant 0 : index
    %3 = vector.load %arg3[%c0_3, %c0_4] : memref<1x48xf32, #tpu.memory_space<vmem>>, vector<1x48xf32>
    %4 = vector.broadcast %3 : vector<1x48xf32> to vector<16x48xf32>
    %5 = arith.addf %2, %4 : vector<16x48xf32>
    %c0_5 = arith.constant 0 : index
    %c0_6 = arith.constant 0 : index
    %6 = vector.load %arg4[%c0_5, %c0_6] : memref<16x32xf32, #tpu.memory_space<vmem>>, vector<16x32xf32>
    %cst_7 = arith.constant 0.000000e+00 : f32
    %7 = vector.broadcast %cst_7 : f32 to vector<16x32xf32>
    %8 = vector.extract_strided_slice %5 {offsets = [0, 0], sizes = [16, 8], strides = [1, 1]} : vector<16x48xf32> to vector<16x8xf32>
    %9 = vector.shape_cast %8 : vector<16x8xf32> to vector<2x8x8xf32>
    %10 = vector.extract_strided_slice %5 {offsets = [0, 16], sizes = [16, 8], strides = [1, 1]} : vector<16x48xf32> to vector<16x8xf32>
    %11 = vector.shape_cast %10 : vector<16x8xf32> to vector<2x8x8xf32>
    %12 = vector.extract_strided_slice %5 {offsets = [0, 32], sizes = [16, 8], strides = [1, 1]} : vector<16x48xf32> to vector<16x8xf32>
    %13 = vector.shape_cast %12 : vector<16x8xf32> to vector<2x8x8xf32>
    %cst_8 = arith.constant dense<0.000000e+00> : vector<2x8x8xf32>
    %14 = tpu.matmul %9, %11, %cst_8 {dimension_numbers = #tpu.dot_dimension_numbers<[2], [2], [1], [1], [0, 0, 0, 1, 1, 1], [0], [0]>} : vector<2x8x8xf32>, vector<2x8x8xf32>, vector<2x8x8xf32> -> vector<2x8x8xf32>
    %cst_9 = arith.constant dense<0xFF800000> : vector<2x8xf32>
    %15 = vector.multi_reduction <maximumf>, %14, %cst_9 [2] : vector<2x8x8xf32> to vector<2x8xf32>
    %16 = vector.shape_cast %15 : vector<2x8xf32> to vector<2x8x1xf32>
    %17 = vector.broadcast %16 : vector<2x8x1xf32> to vector<2x8x8xf32>
    %18 = arith.subf %14, %17 : vector<2x8x8xf32>
    %19 = math.exp %18 : vector<2x8x8xf32>
    %cst_10 = arith.constant dense<0.000000e+00> : vector<2x8xf32>
    %20 = vector.multi_reduction <add>, %19, %cst_10 [2] : vector<2x8x8xf32> to vector<2x8xf32>
    %21 = vector.shape_cast %20 : vector<2x8xf32> to vector<2x8x1xf32>
    %cst_11 = arith.constant dense<0.000000e+00> : vector<2x8x8xf32>
    %22 = tpu.matmul %19, %13, %cst_11 {dimension_numbers = #tpu.dot_dimension_numbers<[2], [1], [1], [2], [0, 0, 0, 1, 1, 2], [0], [0]>} : vector<2x8x8xf32>, vector<2x8x8xf32>, vector<2x8x8xf32> -> vector<2x8x8xf32>
    %23 = vector.broadcast %21 : vector<2x8x1xf32> to vector<2x8x8xf32>
    %24 = arith.divf %22, %23 : vector<2x8x8xf32>
    %25 = vector.shape_cast %24 : vector<2x8x8xf32> to vector<16x8xf32>
    %26 = vector.extract_strided_slice %6 {offsets = [0, 0], sizes = [8, 32], strides = [1, 1]} : vector<16x32xf32> to vector<8x32xf32>
    %cst_12 = arith.constant dense<0.000000e+00> : vector<16x32xf32>
    %27 = tpu.matmul %25, %26, %cst_12 {dimension_numbers = #tpu.dot_dimension_numbers<[1], [0], [0], [1], [0, 0, 1, 1], [], []>} : vector<16x8xf32>, vector<8x32xf32>, vector<16x32xf32> -> vector<16x32xf32>
    %28 = arith.addf %7, %27 : vector<16x32xf32>
    %29 = vector.extract_strided_slice %5 {offsets = [0, 8], sizes = [16, 8], strides = [1, 1]} : vector<16x48xf32> to vector<16x8xf32>
    %30 = vector.shape_cast %29 : vector<16x8xf32> to vector<2x8x8xf32>
    %31 = vector.extract_strided_slice %5 {offsets = [0, 24], sizes = [16, 8], strides = [1, 1]} : vector<16x48xf32> to vector<16x8xf32>
    %32 = vector.shape_cast %31 : vector<16x8xf32> to vector<2x8x8xf32>
    %33 = vector.extract_strided_slice %5 {offsets = [0, 40], sizes = [16, 8], strides = [1, 1]} : vector<16x48xf32> to vector<16x8xf32>
    %34 = vector.shape_cast %33 : vector<16x8xf32> to vector<2x8x8xf32>
    %cst_13 = arith.constant dense<0.000000e+00> : vector<2x8x8xf32>
    %35 = tpu.matmul %30, %32, %cst_13 {dimension_numbers = #tpu.dot_dimension_numbers<[2], [2], [1], [1], [0, 0, 0, 1, 1, 1], [0], [0]>} : vector<2x8x8xf32>, vector<2x8x8xf32>, vector<2x8x8xf32> -> vector<2x8x8xf32>
    %cst_14 = arith.constant dense<0xFF800000> : vector<2x8xf32>
    %36 = vector.multi_reduction <maximumf>, %35, %cst_14 [2] : vector<2x8x8xf32> to vector<2x8xf32>
    %37 = vector.shape_cast %36 : vector<2x8xf32> to vector<2x8x1xf32>
    %38 = vector.broadcast %37 : vector<2x8x1xf32> to vector<2x8x8xf32>
    %39 = arith.subf %35, %38 : vector<2x8x8xf32>
    %40 = math.exp %39 : vector<2x8x8xf32>
    %cst_15 = arith.constant dense<0.000000e+00> : vector<2x8xf32>
    %41 = vector.multi_reduction <add>, %40, %cst_15 [2] : vector<2x8x8xf32> to vector<2x8xf32>
    %42 = vector.shape_cast %41 : vector<2x8xf32> to vector<2x8x1xf32>
    %cst_16 = arith.constant dense<0.000000e+00> : vector<2x8x8xf32>
    %43 = tpu.matmul %40, %34, %cst_16 {dimension_numbers = #tpu.dot_dimension_numbers<[2], [1], [1], [2], [0, 0, 0, 1, 1, 2], [0], [0]>} : vector<2x8x8xf32>, vector<2x8x8xf32>, vector<2x8x8xf32> -> vector<2x8x8xf32>
    %44 = vector.broadcast %42 : vector<2x8x1xf32> to vector<2x8x8xf32>
    %45 = arith.divf %43, %44 : vector<2x8x8xf32>
    %46 = vector.shape_cast %45 : vector<2x8x8xf32> to vector<16x8xf32>
    %47 = vector.extract_strided_slice %6 {offsets = [8, 0], sizes = [8, 32], strides = [1, 1]} : vector<16x32xf32> to vector<8x32xf32>
    %cst_17 = arith.constant dense<0.000000e+00> : vector<16x32xf32>
    %48 = tpu.matmul %46, %47, %cst_17 {dimension_numbers = #tpu.dot_dimension_numbers<[1], [0], [0], [1], [0, 0, 1, 1], [], []>} : vector<16x8xf32>, vector<8x32xf32>, vector<16x32xf32> -> vector<16x32xf32>
    %49 = arith.addf %28, %48 : vector<16x32xf32>
    %c0_18 = arith.constant 0 : index
    %c0_19 = arith.constant 0 : index
    %50 = vector.load %arg5[%c0_18, %c0_19] : memref<1x32xf32, #tpu.memory_space<vmem>>, vector<1x32xf32>
    %51 = vector.broadcast %50 : vector<1x32xf32> to vector<16x32xf32>
    %52 = arith.addf %49, %51 : vector<16x32xf32>
    %53 = arith.addf %0, %52 : vector<16x32xf32>
    %cst_20 = arith.constant dense<0.000000e+00> : vector<16xf32>
    %54 = vector.multi_reduction <add>, %53, %cst_20 [1] : vector<16x32xf32> to vector<16xf32>
    %55 = vector.shape_cast %54 : vector<16xf32> to vector<16x1xf32>
    %cst_21 = arith.constant 3.200000e+01 : f32
    %56 = vector.broadcast %cst_21 : f32 to vector<16x1xf32>
    %57 = arith.divf %55, %56 : vector<16x1xf32>
    %58 = vector.broadcast %57 : vector<16x1xf32> to vector<16x32xf32>
    %59 = arith.subf %53, %58 : vector<16x32xf32>
    %60 = arith.mulf %59, %59 : vector<16x32xf32>
    %cst_22 = arith.constant dense<0.000000e+00> : vector<16xf32>
    %61 = vector.multi_reduction <add>, %60, %cst_22 [1] : vector<16x32xf32> to vector<16xf32>
    %62 = vector.shape_cast %61 : vector<16xf32> to vector<16x1xf32>
    %cst_23 = arith.constant 3.200000e+01 : f32
    %63 = vector.broadcast %cst_23 : f32 to vector<16x1xf32>
    %64 = arith.divf %62, %63 : vector<16x1xf32>
    %65 = vector.broadcast %57 : vector<16x1xf32> to vector<16x32xf32>
    %66 = arith.subf %53, %65 : vector<16x32xf32>
    %cst_24 = arith.constant 9.99999974E-6 : f32
    %67 = vector.broadcast %cst_24 : f32 to vector<16x1xf32>
    %68 = arith.addf %64, %67 : vector<16x1xf32>
    %69 = math.rsqrt %68 : vector<16x1xf32>
    %70 = vector.broadcast %69 : vector<16x1xf32> to vector<16x32xf32>
    %71 = arith.mulf %66, %70 : vector<16x32xf32>
    %c0_25 = arith.constant 0 : index
    %c0_26 = arith.constant 0 : index
    %72 = vector.load %arg6[%c0_25, %c0_26] : memref<1x32xf32, #tpu.memory_space<vmem>>, vector<1x32xf32>
    %73 = vector.broadcast %72 : vector<1x32xf32> to vector<16x32xf32>
    %74 = arith.mulf %71, %73 : vector<16x32xf32>
    %c0_27 = arith.constant 0 : index
    %c0_28 = arith.constant 0 : index
    %75 = vector.load %arg7[%c0_27, %c0_28] : memref<1x32xf32, #tpu.memory_space<vmem>>, vector<1x32xf32>
    %76 = vector.broadcast %75 : vector<1x32xf32> to vector<16x32xf32>
    %77 = arith.addf %74, %76 : vector<16x32xf32>
    %c0_29 = arith.constant 0 : index
    %c0_30 = arith.constant 0 : index
    %78 = vector.load %arg8[%c0_29, %c0_30] : memref<16x32xf32, #tpu.memory_space<vmem>>, vector<16x32xf32>
    tpu.vector_store %arg8[%c0_29, %c0_30], %77 {strides = array<i32>} : memref<16x32xf32, #tpu.memory_space<vmem>>, vector<16x32xf32>,
    return
  }
  func.func @transform_0(%arg0: i32) -> (i32, i32) {
    %c0_i32 = arith.constant 0 : i32
    %c0_i32_0 = arith.constant 0 : i32
    %c0_i32_1 = arith.constant 0 : i32
    return %c0_i32, %c0_i32_0 : i32, i32
  }
  func.func @transform_1(%arg0: i32) -> (i32, i32) {
    %c0_i32 = arith.constant 0 : i32
    %c0_i32_0 = arith.constant 0 : i32
    %c0_i32_1 = arith.constant 0 : i32
    return %c0_i32, %c0_i32_0 : i32, i32
  }
  func.func @transform_2(%arg0: i32) -> (i32, i32) {
    %c0_i32 = arith.constant 0 : i32
    %c0_i32_0 = arith.constant 0 : i32
    %c0_i32_1 = arith.constant 0 : i32
    return %c0_i32, %c0_i32_0 : i32, i32
  }
  func.func @transform_3(%arg0: i32) -> (i32, i32) {
    %c0_i32 = arith.constant 0 : i32
    %c0_i32_0 = arith.constant 0 : i32
    %c0_i32_1 = arith.constant 0 : i32
    return %c0_i32, %c0_i32_0 : i32, i32
  }
  func.func @transform_4(%arg0: i32) -> (i32, i32) {
    %c0_i32 = arith.constant 0 : i32
    %c0_i32_0 = arith.constant 0 : i32
    %c0_i32_1 = arith.constant 0 : i32
    return %c0_i32, %c0_i32_0 : i32, i32
  }
  func.func @transform_5(%arg0: i32) -> (i32, i32) {
    %c0_i32 = arith.constant 0 : i32
    %c0_i32_0 = arith.constant 0 : i32
    %c0_i32_1 = arith.constant 0 : i32
    return %c0_i32, %c0_i32_0 : i32, i32
  }
  func.func @transform_6(%arg0: i32) -> (i32, i32) {
    %c0_i32 = arith.constant 0 : i32
    %c0_i32_0 = arith.constant 0 : i32
    %c0_i32_1 = arith.constant 0 : i32
    return %c0_i32, %c0_i32_0 : i32, i32
  }
  func.func @transform_7(%arg0: i32) -> (i32, i32) {
    %c0_i32 = arith.constant 0 : i32
    %c0_i32_0 = arith.constant 0 : i32
    %c0_i32_1 = arith.constant 0 : i32
    return %c0_i32, %c0_i32_0 : i32, i32
  }
}

</mosaic_0001>

<llo_original>
// kernel: tpu_custom_call.1
$region0: #{tpu_custom_call.1}
  #allocation0 [shape = 'u32[]', space=smem, size = 0x4, offset = 0x4, fixed_abs, tag = 'smem constant byte address 0x4 - core index']
  #allocation1 [shape = 'u32[144,128]{1,0:T(1,128)}', space=vmem, size = 0x12000, scoped, tag = 'internal scratch']
  %s0 = inlined_call_operand.hbm [shape: f32[16,32], index: 0, kind: input, shape index: {}]
  %s1 = inlined_call_operand.hbm [shape: f32[32,48], index: 1, kind: input, shape index: {}]
  %s2 = inlined_call_operand.vmem [shape: f32[1,48], index: 2, kind: input, shape index: {}]
  %s3 = inlined_call_operand.hbm [shape: f32[16,32], index: 3, kind: input, shape index: {}]
  %s4 = inlined_call_operand.vmem [shape: f32[1,32], index: 4, kind: input, shape index: {}]
  %s5 = inlined_call_operand.vmem [shape: f32[1,32], index: 5, kind: input, shape index: {}]
  %s6 = inlined_call_operand.vmem [shape: f32[1,32], index: 6, kind: input, shape index: {}]
  %s7 = inlined_call_operand.hbm [shape: f32[16,32], index: 7, kind: output, shape index: {}]
  %s8 = sld [smem:[#allocation0]]
  $region50: #{tpu_custom_call.1} parent=0
    _
  %s10 = ssub.s32 1, %s8
  %s11 = scalar_select 0, %s10, %s8
  $region1: #{tpu_custom_call.1} parent=0
    #allocation2 [shape = 'u8[8192]{0}', space=vmem, size = 0x2000, scoped, tag = 'input window, operand 0, single buffered']
    #allocation3 [shape = 's32[1]{0}', space=sflag, size = 0x4, scoped, tag = 'scoped memory for tpu_custom_call.1']
    #allocation4 [shape = 's32[1]{0}', space=sflag, size = 0x4, scoped, tag = 'scoped memory for tpu_custom_call.1']
    #allocation5 [shape = 'u8[16384]{0}', space=vmem, size = 0x4000, scoped, tag = 'input window, operand 1, single buffered']
    #allocation6 [shape = 's32[1]{0}', space=sflag, size = 0x4, scoped, tag = 'scoped memory for tpu_custom_call.1']
    #allocation7 [shape = 'u8[8192]{0}', space=vmem, size = 0x2000, scoped, tag = 'input window, operand 3, single buffered']
    #allocation8 [shape = 'u8[8192]{0}', space=vmem, size = 0x2000, scoped, tag = 'output window, operand 0, single buffered']
    %12 = vsyncpa [#allocation3], 0
    %13 = vsyncpa [#allocation6], 0
    %14 = vsyncpa [#allocation4], 0
    // Predicated region
    $region2: #{tpu_custom_call.1} parent=1 // pred_check
      _
    $region3: #{tpu_custom_call.1} parent=1 // pred_check_branch
      %16 = sbr.rel (0) target = $region5
    $region4: #{tpu_custom_call.1} parent=1 // pred_region
      %s18 = ssub.s32 256, 256
      %19 = vsyncadd [#allocation3], %s18
      %s20 = sshll.u32 [#allocation2], 4
      %s21 = int_to_ptr.vmem [resolvable:$true] %s20
      %26 = dma.hbm_to_vmem [thread:$0]  %s0, 256, %s21, [#allocation3], 128, 128, 8
    $region5: #{tpu_custom_call.1} parent=1 // pred_fallthru
      _
    // Predicated region
    $region6: #{tpu_custom_call.1} parent=1 // pred_check
      _
    $region7: #{tpu_custom_call.1} parent=1 // pred_check_branch
      %28 = sbr.rel (0) target = $region9
    $region8: #{tpu_custom_call.1} parent=1 // pred_region
      %s30 = ssub.s32 512, 512
      %31 = vsyncadd [#allocation6], %s30
      %s32 = sshll.u32 [#allocation5], 4
      %s33 = int_to_ptr.vmem [resolvable:$true] %s32
      %38 = dma.hbm_to_vmem [thread:$0]  %s1, 512, %s33, [#allocation6], 128, 128, 8
    $region9: #{tpu_custom_call.1} parent=1 // pred_fallthru
      _
    // Predicated region
    $region10: #{tpu_custom_call.1} parent=1 // pred_check
      _
    $region11: #{tpu_custom_call.1} parent=1 // pred_check_branch
      %40 = sbr.rel (0) target = $region13
    $region12: #{tpu_custom_call.1} parent=1 // pred_region
      _
    $region13: #{tpu_custom_call.1} parent=1 // pred_fallthru
      _
    // Predicated region
    $region14: #{tpu_custom_call.1} parent=1 // pred_check
      _
    $region15: #{tpu_custom_call.1} parent=1 // pred_check_branch
      %42 = sbr.rel (0) target = $region17
    $region16: #{tpu_custom_call.1} parent=1 // pred_region
      %s44 = ssub.s32 256, 256
      %45 = vsyncadd [#allocation6], %s44
      %s46 = sshll.u32 [#allocation7], 4
      %s47 = int_to_ptr.vmem [resolvable:$true] %s46
      %52 = dma.hbm_to_vmem [thread:$0]  %s3, 256, %s47, [#allocation6], 128, 128, 8
    $region17: #{tpu_custom_call.1} parent=1 // pred_fallthru
      _
    // Predicated region
    $region18: #{tpu_custom_call.1} parent=1 // pred_check
      _
    $region19: #{tpu_custom_call.1} parent=1 // pred_check_branch
      %54 = sbr.rel (0) target = $region21
    $region20: #{tpu_custom_call.1} parent=1 // pred_region
      _
    $region21: #{tpu_custom_call.1} parent=1 // pred_fallthru
      _
    // Predicated region
    $region22: #{tpu_custom_call.1} parent=1 // pred_check
      _
    $region23: #{tpu_custom_call.1} parent=1 // pred_check_branch
      %56 = sbr.rel (0) target = $region25
    $region24: #{tpu_custom_call.1} parent=1 // pred_region
      _
    $region25: #{tpu_custom_call.1} parent=1 // pred_fallthru
      _
    // Predicated region
    $region26: #{tpu_custom_call.1} parent=1 // pred_check
      _
    $region27: #{tpu_custom_call.1} parent=1 // pred_check_branch
      %58 = sbr.rel (0) target = $region29
    $region28: #{tpu_custom_call.1} parent=1 // pred_region
      _
    $region29: #{tpu_custom_call.1} parent=1 // pred_fallthru
      _
    // Predicated region
    $region30: #{tpu_custom_call.1} parent=1 // pred_check
      _
    $region31: #{tpu_custom_call.1} parent=1 // pred_check_branch
      %60 = sbr.rel (0) target = $region33
    $region32: #{tpu_custom_call.1} parent=1 // pred_region
      %61 = dma.done [#allocation3], 256
    $region33: #{tpu_custom_call.1} parent=1 // pred_fallthru
      _
    // Predicated region
    $region34: #{tpu_custom_call.1} parent=1 // pred_check
      _
    $region35: #{tpu_custom_call.1} parent=1 // pred_check_branch
      %63 = sbr.rel (0) target = $region37
    $region36: #{tpu_custom_call.1} parent=1 // pred_region
      %64 = dma.done [#allocation6], 512
    $region37: #{tpu_custom_call.1} parent=1 // pred_fallthru
      _
    // Predicated region
    $region38: #{tpu_custom_call.1} parent=1 // pred_check
      _
    $region39: #{tpu_custom_call.1} parent=1 // pred_check_branch
      %66 = sbr.rel (0) target = $region41
    $region40: #{tpu_custom_call.1} parent=1 // pred_region
      %67 = dma.done [#allocation6], 256
    $region41: #{tpu_custom_call.1} parent=1 // pred_fallthru
      _
    %v68 = vld [vmem:[#allocation2] sm:$0xff]
    %v69 = vld [vmem:[#allocation2 + $0x8] sm:$0xff]
    %v70 = vld [vmem:[#allocation5] sm:$0xff]
    %v71 = vld [vmem:[#allocation5 + $0x8] sm:$0xff]
    %v72 = vld [vmem:[#allocation5 + $0x10] sm:$0xff]
    %v73 = vld [vmem:[#allocation5 + $0x18] sm:$0xff]
    %v74 = vld [vmem:[%s2] sm:$0x1]
    %v76 = vlaneseq
    %v77 = vshrl.u32 %v76, 7
    %v78 = vsub.s32 0, %v77
    %v79 = vrot.slane %v74, %v78
    %vm81 = vcmask 261120
    %v83 = vsel %vm81, %v68, 0
    %v86 = vsel %vm81, %v69, 0
    %88 = vmatprep.subr.mxu0 0.0
    %89 = vmatpush1.msra.mxu0 %v70
    %90 = vmatprep.subr.mxu0 0.0
    %91 = vmatpush1.msra.mxu0 %v71
    %92 = vmatprep.subr.mxu0 0.0
    %93 = vmatpush1.msra.mxu0 %v72
    %94 = vmatprep.subr.mxu0 0.0
    %95 = vmatpush1.msra.mxu0 %v73
    %96 = vmatprep.subr.mxu0 0.0
    %97 = vmatpush1.msra.mxu0 0.0
    %98 = vmatprep.subr.mxu0 0.0
    %99 = vmatpush1.msra.mxu0 0.0
    %100 = vmatprep.subr.mxu0 0.0
    %101 = vmatpush1.msra.mxu0 0.0
    %102 = vmatprep.subr.mxu0 0.0
    %103 = vmatpush1.msra.mxu0 0.0
    %104 = vmatprep.subr.mxu0 0.0
    %105 = vmatpush1.msra.mxu0 0.0
    %106 = vmatprep.subr.mxu0 0.0
    %107 = vmatpush1.msra.mxu0 0.0
    %108 = vmatprep.subr.mxu0 0.0
    %109 = vmatpush1.msra.mxu0 0.0
    %110 = vmatprep.subr.mxu0 0.0
    %111 = vmatpush1.msra.mxu0 0.0
    %112 = vmatprep.subr.mxu0 0.0
    %113 = vmatpush1.msra.mxu0 0.0
    %114 = vmatprep.subr.mxu0 0.0
    %115 = vmatpush1.msra.mxu0 0.0
    %116 = vmatprep.subr.mxu0 0.0
    %117 = vmatpush1.msra.mxu0 0.0
    %118 = vmatprep.subr.mxu0 0.0
    %119 = vmatpush1.msra.mxu0 0.0
    %120 = vmatprep.subr.mxu0 0.0
    %121 = vmatpush1.msra.mxu0 0.0
    %122 = vmatprep.subr.mxu0 0.0
    %123 = vmatpush1.msra.mxu0 0.0
    %124 = vmatprep.subr.mxu0 0.0
    %125 = vmatpush1.msra.mxu0 0.0
    %126 = vmatprep.subr.mxu0 0.0
    %127 = vmatpush1.msra.mxu0 0.0
    %128 = vmatprep.subr.mxu0 0.0
    %129 = vmatpush1.msra.mxu0 0.0
    %130 = vmatprep.subr.mxu0 0.0
    %131 = vmatpush1.msra.mxu0 0.0
    %132 = vmatprep.subr.mxu0 0.0
    %133 = vmatpush1.msra.mxu0 0.0
    %134 = vmatprep.subr.mxu0 0.0
    %135 = vmatpush1.msra.mxu0 0.0
    %136 = vmatprep.subr.mxu0 0.0
    %137 = vmatpush1.msra.mxu0 0.0
    %138 = vmatprep.subr.mxu0 0.0
    %139 = vmatpush1.msra.mxu0 0.0
    %140 = vmatprep.subr.mxu0 0.0
    %141 = vmatpush1.msra.mxu0 0.0
    %142 = vmatprep.subr.mxu0 0.0
    %143 = vmatpush1.msra.mxu0 0.0
    %144 = vmatprep.subr.mxu0 0.0
    %145 = vmatpush1.msra.mxu0 0.0
    %146 = vmatprep.subr.mxu0 0.0
    %147 = vmatpush1.msra.mxu0 0.0
    %148 = vmatprep.subr.mxu0 0.0
    %149 = vmatpush1.msra.mxu0 0.0
    %150 = vmatprep.subr.mxu0 0.0
    %151 = vmatpush1.msra.mxu0 0.0
    %152 = vmatprep.mubr.f32.mxu0 0.0
    %153 = vmatmul.mubr.f32.gmra.mrb[0].mxu0 %v83
    %v154 = vpop.f32.mrb[0].mxu0
    %v155 = vadd.f32 %v79, %v154
    %v156 = vpop.f32.mrb[0].mxu0
    %157 = vmatprep.mubr.f32.mxu0 0.0
    %158 = vmatmul.mubr.f32.gmra.mrb[0].mxu0 %v86
    %v159 = vpop.f32.mrb[0].mxu0
    %v160 = vadd.f32 %v79, %v159
    %v161 = vpop.f32.mrb[0].mxu0
    %162 = vdwg.mxu0
    %v163 = vld [vmem:[#allocation7] sm:$0xff]
    %v164 = vld [vmem:[#allocation7 + $0x8] sm:$0xff]
    %166 = vrot.lane.b32.xlu0 %v155, 112
    %v167 = vpop.permute.xlu0 %166
    %vm168 = vcmask 64512
    %v169 = vsel %vm168, %v155, 0
    %v171 = vsel %vm168, %v167, 0
    %173 = vmatprep.subr.mxu0 0.0
    %174 = vmatpush1.xpose.msra.mxu0 %v171
    %175 = vmatprep.subr.mxu0 0.0
    %176 = vmatpush1.xpose.msra.mxu0 0.0
    %177 = vmatprep.subr.mxu0 0.0
    %178 = vmatpush1.xpose.msra.mxu0 0.0
    %179 = vmatprep.subr.mxu0 0.0
    %180 = vmatpush1.xpose.msra.mxu0 0.0
    %181 = vmatprep.subr.mxu0 0.0
    %182 = vmatpush1.xpose.msra.mxu0 0.0
    %183 = vmatprep.subr.mxu0 0.0
    %184 = vmatpush1.xpose.msra.mxu0 0.0
    %185 = vmatprep.subr.mxu0 0.0
    %186 = vmatpush1.xpose.msra.mxu0 0.0
    %187 = vmatprep.subr.mxu0 0.0
    %188 = vmatpush1.xpose.msra.mxu0 0.0
    %189 = vmatprep.subr.mxu0 0.0
    %190 = vmatpush1.xpose.msra.mxu0 0.0
    %191 = vmatprep.subr.mxu0 0.0
    %192 = vmatpush1.xpose.msra.mxu0 0.0
    %193 = vmatprep.subr.mxu0 0.0
    %194 = vmatpush1.xpose.msra.mxu0 0.0
    %195 = vmatprep.subr.mxu0 0.0
    %196 = vmatpush1.xpose.msra.mxu0 0.0
    %197 = vmatprep.subr.mxu0 0.0
    %198 = vmatpush1.xpose.msra.mxu0 0.0
    %199 = vmatprep.subr.mxu0 0.0
    %200 = vmatpush1.xpose.msra.mxu0 0.0
    %201 = vmatprep.subr.mxu0 0.0
    %202 = vmatpush1.xpose.msra.mxu0 0.0
    %203 = vmatprep.subr.mxu0 0.0
    %204 = vmatpush1.xpose.msra.mxu0 0.0
    %205 = vmatprep.subr.mxu0 0.0
    %206 = vmatpush1.xpose.msra.mxu0 0.0
    %207 = vmatprep.subr.mxu0 0.0
    %208 = vmatpush1.xpose.msra.mxu0 0.0
    %209 = vmatprep.subr.mxu0 0.0
    %210 = vmatpush1.xpose.msra.mxu0 0.0
    %211 = vmatprep.subr.mxu0 0.0
    %212 = vmatpush1.xpose.msra.mxu0 0.0
    %213 = vmatprep.subr.mxu0 0.0
    %214 = vmatpush1.xpose.msra.mxu0 0.0
    %215 = vmatprep.subr.mxu0 0.0
    %216 = vmatpush1.xpose.msra.mxu0 0.0
    %217 = vmatprep.subr.mxu0 0.0
    %218 = vmatpush1.xpose.msra.mxu0 0.0
    %219 = vmatprep.subr.mxu0 0.0
    %220 = vmatpush1.xpose.msra.mxu0 0.0
    %221 = vmatprep.subr.mxu0 0.0
    %222 = vmatpush1.xpose.msra.mxu0 0.0
    %223 = vmatprep.subr.mxu0 0.0
    %224 = vmatpush1.xpose.msra.mxu0 0.0
    %225 = vmatprep.subr.mxu0 0.0
    %226 = vmatpush1.xpose.msra.mxu0 0.0
    %227 = vmatprep.subr.mxu0 0.0
    %228 = vmatpush1.xpose.msra.mxu0 0.0
    %229 = vmatprep.subr.mxu0 0.0
    %230 = vmatpush1.xpose.msra.mxu0 0.0
    %231 = vmatprep.subr.mxu0 0.0
    %232 = vmatpush1.xpose.msra.mxu0 0.0
    %233 = vmatprep.subr.mxu0 0.0
    %234 = vmatpush1.xpose.msra.mxu0 0.0
    %235 = vmatprep.subr.mxu0 0.0
    %236 = vmatpush1.xpose.msra.mxu0 0.0
    %237 = vmatprep.mubr.f32.mxu0 0.0
    %238 = vmatmul.mubr.f32.gmra.mrb[0].mxu0 %v169
    %v239 = vpop.f32.mrb[0].mxu0
    %v240 = vadd.f32 0.0, %v239
    %v241 = vpop.f32.mrb[0].mxu0
    %242 = vdwg.mxu0
    %244 = vrot.lane.b32.xlu0 %v160, 112
    %v245 = vpop.permute.xlu0 %244
    %v246 = vsel %vm168, %v160, 0
    %v248 = vsel %vm168, %v245, 0
    %250 = vmatprep.subr.mxu0 0.0
    %251 = vmatpush1.xpose.msra.mxu0 %v248
    %252 = vmatprep.subr.mxu0 0.0
    %253 = vmatpush1.xpose.msra.mxu0 0.0
    %254 = vmatprep.subr.mxu0 0.0
    %255 = vmatpush1.xpose.msra.mxu0 0.0
    %256 = vmatprep.subr.mxu0 0.0
    %257 = vmatpush1.xpose.msra.mxu0 0.0
    %258 = vmatprep.subr.mxu0 0.0
    %259 = vmatpush1.xpose.msra.mxu0 0.0
    %260 = vmatprep.subr.mxu0 0.0
    %261 = vmatpush1.xpose.msra.mxu0 0.0
    %262 = vmatprep.subr.mxu0 0.0
    %263 = vmatpush1.xpose.msra.mxu0 0.0
    %264 = vmatprep.subr.mxu0 0.0
    %265 = vmatpush1.xpose.msra.mxu0 0.0
    %266 = vmatprep.subr.mxu0 0.0
    %267 = vmatpush1.xpose.msra.mxu0 0.0
    %268 = vmatprep.subr.mxu0 0.0
    %269 = vmatpush1.xpose.msra.mxu0 0.0
    %270 = vmatprep.subr.mxu0 0.0
    %271 = vmatpush1.xpose.msra.mxu0 0.0
    %272 = vmatprep.subr.mxu0 0.0
    %273 = vmatpush1.xpose.msra.mxu0 0.0
    %274 = vmatprep.subr.mxu0 0.0
    %275 = vmatpush1.xpose.msra.mxu0 0.0
    %276 = vmatprep.subr.mxu0 0.0
    %277 = vmatpush1.xpose.msra.mxu0 0.0
    %278 = vmatprep.subr.mxu0 0.0
    %279 = vmatpush1.xpose.msra.mxu0 0.0
    %280 = vmatprep.subr.mxu0 0.0
    %281 = vmatpush1.xpose.msra.mxu0 0.0
    %282 = vmatprep.subr.mxu0 0.0
    %283 = vmatpush1.xpose.msra.mxu0 0.0
    %284 = vmatprep.subr.mxu0 0.0
    %285 = vmatpush1.xpose.msra.mxu0 0.0
    %286 = vmatprep.subr.mxu0 0.0
    %287 = vmatpush1.xpose.msra.mxu0 0.0
    %288 = vmatprep.subr.mxu0 0.0
    %289 = vmatpush1.xpose.msra.mxu0 0.0
    %290 = vmatprep.subr.mxu0 0.0
    %291 = vmatpush1.xpose.msra.mxu0 0.0
    %292 = vmatprep.subr.mxu0 0.0
    %293 = vmatpush1.xpose.msra.mxu0 0.0
    %294 = vmatprep.subr.mxu0 0.0
    %295 = vmatpush1.xpose.msra.mxu0 0.0
    %296 = vmatprep.subr.mxu0 0.0
    %297 = vmatpush1.xpose.msra.mxu0 0.0
    %298 = vmatprep.subr.mxu0 0.0
    %299 = vmatpush1.xpose.msra.mxu0 0.0
    %300 = vmatprep.subr.mxu0 0.0
    %301 = vmatpush1.xpose.msra.mxu0 0.0
    %302 = vmatprep.subr.mxu0 0.0
    %303 = vmatpush1.xpose.msra.mxu0 0.0
    %304 = vmatprep.subr.mxu0 0.0
    %305 = vmatpush1.xpose.msra.mxu0 0.0
    %306 = vmatprep.subr.mxu0 0.0
    %307 = vmatpush1.xpose.msra.mxu0 0.0
    %308 = vmatprep.subr.mxu0 0.0
    %309 = vmatpush1.xpose.msra.mxu0 0.0
    %310 = vmatprep.subr.mxu0 0.0
    %311 = vmatpush1.xpose.msra.mxu0 0.0
    %312 = vmatprep.subr.mxu0 0.0
    %313 = vmatpush1.xpose.msra.mxu0 0.0
    %314 = vmatprep.mubr.f32.mxu0 0.0
    %315 = vmatmul.mubr.f32.gmra.mrb[0].mxu0 %v246
    %v316 = vpop.f32.mrb[0].mxu0
    %v317 = vadd.f32 0.0, %v316
    %v318 = vpop.f32.mrb[0].mxu0
    %319 = vdwg.mxu0
    %v320 = vsel %vm168, %v240, -inf
    %321 = vmax.xlane.f32.xlu0 %v320
    %v322 = vpop.xlane.xlu0 %321
    %v323 = vsel %vm168, %v317, -inf
    %324 = vmax.xlane.f32.xlu0 %v323
    %v325 = vpop.xlane.xlu0 %324
    %v326 = vsub.f32 %v240, %v322
    %v327 = vsub.f32 %v317, %v325
    %v328 = vmul.f32 %v326, 1.442695
    %v329 = vpow.pop %v328
    %v330 = vmul.f32 %v327, 1.442695
    %v331 = vpow.pop %v330
    %v332 = vsel %vm168, %v329, 0.0
    %333 = vadd.xlane.f32.xlu0 %v332
    %v334 = vpop.xlane.xlu0 %333
    %v335 = vsel %vm168, %v331, 0.0
    %336 = vadd.xlane.f32.xlu0 %v335
    %v337 = vpop.xlane.xlu0 %336
    %338 = vrot.lane.b32.xlu0 %v155, 96
    %v339 = vpop.permute.xlu0 %338
    %v342 = vsel %vm168, %v329, 0
    %344 = vmatprep.subr.mxu0 0.0
    %345 = vmatpush1.msra.mxu0 %v339
    %346 = vmatprep.subr.mxu0 0.0
    %347 = vmatpush1.msra.mxu0 0.0
    %348 = vmatprep.subr.mxu0 0.0
    %349 = vmatpush1.msra.mxu0 0.0
    %350 = vmatprep.subr.mxu0 0.0
    %351 = vmatpush1.msra.mxu0 0.0
    %352 = vmatprep.subr.mxu0 0.0
    %353 = vmatpush1.msra.mxu0 0.0
    %354 = vmatprep.subr.mxu0 0.0
    %355 = vmatpush1.msra.mxu0 0.0
    %356 = vmatprep.subr.mxu0 0.0
    %357 = vmatpush1.msra.mxu0 0.0
    %358 = vmatprep.subr.mxu0 0.0
    %359 = vmatpush1.msra.mxu0 0.0
    %360 = vmatprep.subr.mxu0 0.0
    %361 = vmatpush1.msra.mxu0 0.0
    %362 = vmatprep.subr.mxu0 0.0
    %363 = vmatpush1.msra.mxu0 0.0
    %364 = vmatprep.subr.mxu0 0.0
    %365 = vmatpush1.msra.mxu0 0.0
    %366 = vmatprep.subr.mxu0 0.0
    %367 = vmatpush1.msra.mxu0 0.0
    %368 = vmatprep.subr.mxu0 0.0
    %369 = vmatpush1.msra.mxu0 0.0
    %370 = vmatprep.subr.mxu0 0.0
    %371 = vmatpush1.msra.mxu0 0.0
    %372 = vmatprep.subr.mxu0 0.0
    %373 = vmatpush1.msra.mxu0 0.0
    %374 = vmatprep.subr.mxu0 0.0
    %375 = vmatpush1.msra.mxu0 0.0
    %376 = vmatprep.subr.mxu0 0.0
    %377 = vmatpush1.msra.mxu0 0.0
    %378 = vmatprep.subr.mxu0 0.0
    %379 = vmatpush1.msra.mxu0 0.0
    %380 = vmatprep.subr.mxu0 0.0
    %381 = vmatpush1.msra.mxu0 0.0
    %382 = vmatprep.subr.mxu0 0.0
    %383 = vmatpush1.msra.mxu0 0.0
    %384 = vmatprep.subr.mxu0 0.0
    %385 = vmatpush1.msra.mxu0 0.0
    %386 = vmatprep.subr.mxu0 0.0
    %387 = vmatpush1.msra.mxu0 0.0
    %388 = vmatprep.subr.mxu0 0.0
    %389 = vmatpush1.msra.mxu0 0.0
    %390 = vmatprep.subr.mxu0 0.0
    %391 = vmatpush1.msra.mxu0 0.0
    %392 = vmatprep.subr.mxu0 0.0
    %393 = vmatpush1.msra.mxu0 0.0
    %394 = vmatprep.subr.mxu0 0.0
    %395 = vmatpush1.msra.mxu0 0.0
    %396 = vmatprep.subr.mxu0 0.0
    %397 = vmatpush1.msra.mxu0 0.0
    %398 = vmatprep.subr.mxu0 0.0
    %399 = vmatpush1.msra.mxu0 0.0
    %400 = vmatprep.subr.mxu0 0.0
    %401 = vmatpush1.msra.mxu0 0.0
    %402 = vmatprep.subr.mxu0 0.0
    %403 = vmatpush1.msra.mxu0 0.0
    %404 = vmatprep.subr.mxu0 0.0
    %405 = vmatpush1.msra.mxu0 0.0
    %406 = vmatprep.subr.mxu0 0.0
    %407 = vmatpush1.msra.mxu0 0.0
    %408 = vmatprep.mubr.f32.mxu0 0.0
    %409 = vmatmul.mubr.f32.gmra.mrb[0].mxu0 %v342
    %v410 = vpop.f32.mrb[0].mxu0
    %v411 = vadd.f32 0.0, %v410
    %v412 = vpop.f32.mrb[0].mxu0
    %413 = vdwg.mxu0
    %414 = vrot.lane.b32.xlu0 %v160, 96
    %v415 = vpop.permute.xlu0 %414
    %v418 = vsel %vm168, %v331, 0
    %420 = vmatprep.subr.mxu0 0.0
    %421 = vmatpush1.msra.mxu0 %v415
    %422 = vmatprep.subr.mxu0 0.0
    %423 = vmatpush1.msra.mxu0 0.0
    %424 = vmatprep.subr.mxu0 0.0
    %425 = vmatpush1.msra.mxu0 0.0
    %426 = vmatprep.subr.mxu0 0.0
    %427 = vmatpush1.msra.mxu0 0.0
    %428 = vmatprep.subr.mxu0 0.0
    %429 = vmatpush1.msra.mxu0 0.0
    %430 = vmatprep.subr.mxu0 0.0
    %431 = vmatpush1.msra.mxu0 0.0
    %432 = vmatprep.subr.mxu0 0.0
    %433 = vmatpush1.msra.mxu0 0.0
    %434 = vmatprep.subr.mxu0 0.0
    %435 = vmatpush1.msra.mxu0 0.0
    %436 = vmatprep.subr.mxu0 0.0
    %437 = vmatpush1.msra.mxu0 0.0
    %438 = vmatprep.subr.mxu0 0.0
    %439 = vmatpush1.msra.mxu0 0.0
    %440 = vmatprep.subr.mxu0 0.0
    %441 = vmatpush1.msra.mxu0 0.0
    %442 = vmatprep.subr.mxu0 0.0
    %443 = vmatpush1.msra.mxu0 0.0
    %444 = vmatprep.subr.mxu0 0.0
    %445 = vmatpush1.msra.mxu0 0.0
    %446 = vmatprep.subr.mxu0 0.0
    %447 = vmatpush1.msra.mxu0 0.0
    %448 = vmatprep.subr.mxu0 0.0
    %449 = vmatpush1.msra.mxu0 0.0
    %450 = vmatprep.subr.mxu0 0.0
    %451 = vmatpush1.msra.mxu0 0.0
    %452 = vmatprep.subr.mxu0 0.0
    %453 = vmatpush1.msra.mxu0 0.0
    %454 = vmatprep.subr.mxu0 0.0
    %455 = vmatpush1.msra.mxu0 0.0
    %456 = vmatprep.subr.mxu0 0.0
    %457 = vmatpush1.msra.mxu0 0.0
    %458 = vmatprep.subr.mxu0 0.0
    %459 = vmatpush1.msra.mxu0 0.0
    %460 = vmatprep.subr.mxu0 0.0
    %461 = vmatpush1.msra.mxu0 0.0
    %462 = vmatprep.subr.mxu0 0.0
    %463 = vmatpush1.msra.mxu0 0.0
    %464 = vmatprep.subr.mxu0 0.0
    %465 = vmatpush1.msra.mxu0 0.0
    %466 = vmatprep.subr.mxu0 0.0
    %467 = vmatpush1.msra.mxu0 0.0
    %468 = vmatprep.subr.mxu0 0.0
    %469 = vmatpush1.msra.mxu0 0.0
    %470 = vmatprep.subr.mxu0 0.0
    %471 = vmatpush1.msra.mxu0 0.0
    %472 = vmatprep.subr.mxu0 0.0
    %473 = vmatpush1.msra.mxu0 0.0
    %474 = vmatprep.subr.mxu0 0.0
    %475 = vmatpush1.msra.mxu0 0.0
    %476 = vmatprep.subr.mxu0 0.0
    %477 = vmatpush1.msra.mxu0 0.0
    %478 = vmatprep.subr.mxu0 0.0
    %479 = vmatpush1.msra.mxu0 0.0
    %480 = vmatprep.subr.mxu0 0.0
    %481 = vmatpush1.msra.mxu0 0.0
    %482 = vmatprep.subr.mxu0 0.0
    %483 = vmatpush1.msra.mxu0 0.0
    %484 = vmatprep.mubr.f32.mxu0 0.0
    %485 = vmatmul.mubr.f32.gmra.mrb[0].mxu0 %v418
    %v486 = vpop.f32.mrb[0].mxu0
    %v487 = vadd.f32 0.0, %v486
    %v488 = vpop.f32.mrb[0].mxu0
    %489 = vdwg.mxu0
    %v490 = vrcp.pop %v334
    %v491 = vmul.f32 %v411, %v490
    %v492 = vrcp.pop %v337
    %v493 = vmul.f32 %v487, %v492
    %494 = vrot.lane.b32.xlu0 %v155, 120
    %v495 = vpop.permute.xlu0 %494
    %496 = vrot.lane.b32.xlu0 %v155, 104
    %v497 = vpop.permute.xlu0 %496
    %v498 = vsel %vm168, %v495, 0
    %v500 = vsel %vm168, %v497, 0
    %502 = vmatprep.subr.mxu0 0.0
    %503 = vmatpush1.xpose.msra.mxu0 %v500
    %504 = vmatprep.subr.mxu0 0.0
    %505 = vmatpush1.xpose.msra.mxu0 0.0
    %506 = vmatprep.subr.mxu0 0.0
    %507 = vmatpush1.xpose.msra.mxu0 0.0
    %508 = vmatprep.subr.mxu0 0.0
    %509 = vmatpush1.xpose.msra.mxu0 0.0
    %510 = vmatprep.subr.mxu0 0.0
    %511 = vmatpush1.xpose.msra.mxu0 0.0
    %512 = vmatprep.subr.mxu0 0.0
    %513 = vmatpush1.xpose.msra.mxu0 0.0
    %514 = vmatprep.subr.mxu0 0.0
    %515 = vmatpush1.xpose.msra.mxu0 0.0
    %516 = vmatprep.subr.mxu0 0.0
    %517 = vmatpush1.xpose.msra.mxu0 0.0
    %518 = vmatprep.subr.mxu0 0.0
    %519 = vmatpush1.xpose.msra.mxu0 0.0
    %520 = vmatprep.subr.mxu0 0.0
    %521 = vmatpush1.xpose.msra.mxu0 0.0
    %522 = vmatprep.subr.mxu0 0.0
    %523 = vmatpush1.xpose.msra.mxu0 0.0
    %524 = vmatprep.subr.mxu0 0.0
    %525 = vmatpush1.xpose.msra.mxu0 0.0
    %526 = vmatprep.subr.mxu0 0.0
    %527 = vmatpush1.xpose.msra.mxu0 0.0
    %528 = vmatprep.subr.mxu0 0.0
    %529 = vmatpush1.xpose.msra.mxu0 0.0
    %530 = vmatprep.subr.mxu0 0.0
    %531 = vmatpush1.xpose.msra.mxu0 0.0
    %532 = vmatprep.subr.mxu0 0.0
    %533 = vmatpush1.xpose.msra.mxu0 0.0
    %534 = vmatprep.subr.mxu0 0.0
    %535 = vmatpush1.xpose.msra.mxu0 0.0
    %536 = vmatprep.subr.mxu0 0.0
    %537 = vmatpush1.xpose.msra.mxu0 0.0
    %538 = vmatprep.subr.mxu0 0.0
    %539 = vmatpush1.xpose.msra.mxu0 0.0
    %540 = vmatprep.subr.mxu0 0.0
    %541 = vmatpush1.xpose.msra.mxu0 0.0
    %542 = vmatprep.subr.mxu0 0.0
    %543 = vmatpush1.xpose.msra.mxu0 0.0
    %544 = vmatprep.subr.mxu0 0.0
    %545 = vmatpush1.xpose.msra.mxu0 0.0
    %546 = vmatprep.subr.mxu0 0.0
    %547 = vmatpush1.xpose.msra.mxu0 0.0
    %548 = vmatprep.subr.mxu0 0.0
    %549 = vmatpush1.xpose.msra.mxu0 0.0
    %550 = vmatprep.subr.mxu0 0.0
    %551 = vmatpush1.xpose.msra.mxu0 0.0
    %552 = vmatprep.subr.mxu0 0.0
    %553 = vmatpush1.xpose.msra.mxu0 0.0
    %554 = vmatprep.subr.mxu0 0.0
    %555 = vmatpush1.xpose.msra.mxu0 0.0
    %556 = vmatprep.subr.mxu0 0.0
    %557 = vmatpush1.xpose.msra.mxu0 0.0
    %558 = vmatprep.subr.mxu0 0.0
    %559 = vmatpush1.xpose.msra.mxu0 0.0
    %560 = vmatprep.subr.mxu0 0.0
    %561 = vmatpush1.xpose.msra.mxu0 0.0
    %562 = vmatprep.subr.mxu0 0.0
    %563 = vmatpush1.xpose.msra.mxu0 0.0
    %564 = vmatprep.subr.mxu0 0.0
    %565 = vmatpush1.xpose.msra.mxu0 0.0
    %566 = vmatprep.mubr.f32.mxu0 0.0
    %567 = vmatmul.mubr.f32.gmra.mrb[0].mxu0 %v498
    %v568 = vpop.f32.mrb[0].mxu0
    %v569 = vadd.f32 0.0, %v568
    %v570 = vpop.f32.mrb[0].mxu0
    %571 = vdwg.mxu0
    %572 = vrot.lane.b32.xlu0 %v160, 120
    %v573 = vpop.permute.xlu0 %572
    %574 = vrot.lane.b32.xlu0 %v160, 104
    %v575 = vpop.permute.xlu0 %574
    %v576 = vsel %vm168, %v573, 0
    %v578 = vsel %vm168, %v575, 0
    %580 = vmatprep.subr.mxu0 0.0
    %581 = vmatpush1.xpose.msra.mxu0 %v578
    %582 = vmatprep.subr.mxu0 0.0
    %583 = vmatpush1.xpose.msra.mxu0 0.0
    %584 = vmatprep.subr.mxu0 0.0
    %585 = vmatpush1.xpose.msra.mxu0 0.0
    %586 = vmatprep.subr.mxu0 0.0
    %587 = vmatpush1.xpose.msra.mxu0 0.0
    %588 = vmatprep.subr.mxu0 0.0
    %589 = vmatpush1.xpose.msra.mxu0 0.0
    %590 = vmatprep.subr.mxu0 0.0
    %591 = vmatpush1.xpose.msra.mxu0 0.0
    %592 = vmatprep.subr.mxu0 0.0
    %593 = vmatpush1.xpose.msra.mxu0 0.0
    %594 = vmatprep.subr.mxu0 0.0
    %595 = vmatpush1.xpose.msra.mxu0 0.0
    %596 = vmatprep.subr.mxu0 0.0
    %597 = vmatpush1.xpose.msra.mxu0 0.0
    %598 = vmatprep.subr.mxu0 0.0
    %599 = vmatpush1.xpose.msra.mxu0 0.0
    %600 = vmatprep.subr.mxu0 0.0
    %601 = vmatpush1.xpose.msra.mxu0 0.0
    %602 = vmatprep.subr.mxu0 0.0
    %603 = vmatpush1.xpose.msra.mxu0 0.0
    %604 = vmatprep.subr.mxu0 0.0
    %605 = vmatpush1.xpose.msra.mxu0 0.0
    %606 = vmatprep.subr.mxu0 0.0
    %607 = vmatpush1.xpose.msra.mxu0 0.0
    %608 = vmatprep.subr.mxu0 0.0
    %609 = vmatpush1.xpose.msra.mxu0 0.0
    %610 = vmatprep.subr.mxu0 0.0
    %611 = vmatpush1.xpose.msra.mxu0 0.0
    %612 = vmatprep.subr.mxu0 0.0
    %613 = vmatpush1.xpose.msra.mxu0 0.0
    %614 = vmatprep.subr.mxu0 0.0
    %615 = vmatpush1.xpose.msra.mxu0 0.0
    %616 = vmatprep.subr.mxu0 0.0
    %617 = vmatpush1.xpose.msra.mxu0 0.0
    %618 = vmatprep.subr.mxu0 0.0
    %619 = vmatpush1.xpose.msra.mxu0 0.0
    %620 = vmatprep.subr.mxu0 0.0
    %621 = vmatpush1.xpose.msra.mxu0 0.0
    %622 = vmatprep.subr.mxu0 0.0
    %623 = vmatpush1.xpose.msra.mxu0 0.0
    %624 = vmatprep.subr.mxu0 0.0
    %625 = vmatpush1.xpose.msra.mxu0 0.0
    %626 = vmatprep.subr.mxu0 0.0
    %627 = vmatpush1.xpose.msra.mxu0 0.0
    %628 = vmatprep.subr.mxu0 0.0
    %629 = vmatpush1.xpose.msra.mxu0 0.0
    %630 = vmatprep.subr.mxu0 0.0
    %631 = vmatpush1.xpose.msra.mxu0 0.0
    %632 = vmatprep.subr.mxu0 0.0
    %633 = vmatpush1.xpose.msra.mxu0 0.0
    %634 = vmatprep.subr.mxu0 0.0
    %635 = vmatpush1.xpose.msra.mxu0 0.0
    %636 = vmatprep.subr.mxu0 0.0
    %637 = vmatpush1.xpose.msra.mxu0 0.0
    %638 = vmatprep.subr.mxu0 0.0
    %639 = vmatpush1.xpose.msra.mxu0 0.0
    %640 = vmatprep.subr.mxu0 0.0
    %641 = vmatpush1.xpose.msra.mxu0 0.0
    %642 = vmatprep.subr.mxu0 0.0
    %643 = vmatpush1.xpose.msra.mxu0 0.0
    %644 = vmatprep.mubr.f32.mxu0 0.0
    %645 = vmatmul.mubr.f32.gmra.mrb[0].mxu0 %v576
    %v646 = vpop.f32.mrb[0].mxu0
    %v647 = vadd.f32 0.0, %v646
    %v648 = vpop.f32.mrb[0].mxu0
    %649 = vdwg.mxu0
    %v650 = vsel %vm168, %v569, -inf
    %651 = vmax.xlane.f32.xlu0 %v650
    %v652 = vpop.xlane.xlu0 %651
    %v653 = vsel %vm168, %v647, -inf
    %654 = vmax.xlane.f32.xlu0 %v653
    %v655 = vpop.xlane.xlu0 %654
    %v656 = vsub.f32 %v569, %v652
    %v657 = vsub.f32 %v647, %v655
    %v658 = vmul.f32 %v656, 1.442695
    %v659 = vpow.pop %v658
    %v660 = vmul.f32 %v657, 1.442695
    %v661 = vpow.pop %v660
    %v662 = vsel %vm168, %v659, 0.0
    %663 = vadd.xlane.f32.xlu0 %v662
    %v664 = vpop.xlane.xlu0 %663
    %v665 = vsel %vm168, %v661, 0.0
    %666 = vadd.xlane.f32.xlu0 %v665
    %v667 = vpop.xlane.xlu0 %666
    %668 = vrot.lane.b32.xlu0 %v155, 88
    %v669 = vpop.permute.xlu0 %668
    %v672 = vsel %vm168, %v659, 0
    %674 = vmatprep.subr.mxu0 0.0
    %675 = vmatpush1.msra.mxu0 %v669
    %676 = vmatprep.subr.mxu0 0.0
    %677 = vmatpush1.msra.mxu0 0.0
    %678 = vmatprep.subr.mxu0 0.0
    %679 = vmatpush1.msra.mxu0 0.0
    %680 = vmatprep.subr.mxu0 0.0
    %681 = vmatpush1.msra.mxu0 0.0
    %682 = vmatprep.subr.mxu0 0.0
    %683 = vmatpush1.msra.mxu0 0.0
    %684 = vmatprep.subr.mxu0 0.0
    %685 = vmatpush1.msra.mxu0 0.0
    %686 = vmatprep.subr.mxu0 0.0
    %687 = vmatpush1.msra.mxu0 0.0
    %688 = vmatprep.subr.mxu0 0.0
    %689 = vmatpush1.msra.mxu0 0.0
    %690 = vmatprep.subr.mxu0 0.0
    %691 = vmatpush1.msra.mxu0 0.0
    %692 = vmatprep.subr.mxu0 0.0
    %693 = vmatpush1.msra.mxu0 0.0
    %694 = vmatprep.subr.mxu0 0.0
    %695 = vmatpush1.msra.mxu0 0.0
    %696 = vmatprep.subr.mxu0 0.0
    %697 = vmatpush1.msra.mxu0 0.0
    %698 = vmatprep.subr.mxu0 0.0
    %699 = vmatpush1.msra.mxu0 0.0
    %700 = vmatprep.subr.mxu0 0.0
    %701 = vmatpush1.msra.mxu0 0.0
    %702 = vmatprep.subr.mxu0 0.0
    %703 = vmatpush1.msra.mxu0 0.0
    %704 = vmatprep.subr.mxu0 0.0
    %705 = vmatpush1.msra.mxu0 0.0
    %706 = vmatprep.subr.mxu0 0.0
    %707 = vmatpush1.msra.mxu0 0.0
    %708 = vmatprep.subr.mxu0 0.0
    %709 = vmatpush1.msra.mxu0 0.0
    %710 = vmatprep.subr.mxu0 0.0
    %711 = vmatpush1.msra.mxu0 0.0
    %712 = vmatprep.subr.mxu0 0.0
    %713 = vmatpush1.msra.mxu0 0.0
    %714 = vmatprep.subr.mxu0 0.0
    %715 = vmatpush1.msra.mxu0 0.0
    %716 = vmatprep.subr.mxu0 0.0
    %717 = vmatpush1.msra.mxu0 0.0
    %718 = vmatprep.subr.mxu0 0.0
    %719 = vmatpush1.msra.mxu0 0.0
    %720 = vmatprep.subr.mxu0 0.0
    %721 = vmatpush1.msra.mxu0 0.0
    %722 = vmatprep.subr.mxu0 0.0
    %723 = vmatpush1.msra.mxu0 0.0
    %724 = vmatprep.subr.mxu0 0.0
    %725 = vmatpush1.msra.mxu0 0.0
    %726 = vmatprep.subr.mxu0 0.0
    %727 = vmatpush1.msra.mxu0 0.0
    %728 = vmatprep.subr.mxu0 0.0
    %729 = vmatpush1.msra.mxu0 0.0
    %730 = vmatprep.subr.mxu0 0.0
    %731 = vmatpush1.msra.mxu0 0.0
    %732 = vmatprep.subr.mxu0 0.0
    %733 = vmatpush1.msra.mxu0 0.0
    %734 = vmatprep.subr.mxu0 0.0
    %735 = vmatpush1.msra.mxu0 0.0
    %736 = vmatprep.subr.mxu0 0.0
    %737 = vmatpush1.msra.mxu0 0.0
    %738 = vmatprep.mubr.f32.mxu0 0.0
    %739 = vmatmul.mubr.f32.gmra.mrb[0].mxu0 %v672
    %v740 = vpop.f32.mrb[0].mxu0
    %v741 = vadd.f32 0.0, %v740
    %v742 = vpop.f32.mrb[0].mxu0
    %743 = vdwg.mxu0
    %744 = vrot.lane.b32.xlu0 %v160, 88
    %v745 = vpop.permute.xlu0 %744
    %v748 = vsel %vm168, %v661, 0
    %750 = vmatprep.subr.mxu0 0.0
    %751 = vmatpush1.msra.mxu0 %v745
    %752 = vmatprep.subr.mxu0 0.0
    %753 = vmatpush1.msra.mxu0 0.0
    %754 = vmatprep.subr.mxu0 0.0
    %755 = vmatpush1.msra.mxu0 0.0
    %756 = vmatprep.subr.mxu0 0.0
    %757 = vmatpush1.msra.mxu0 0.0
    %758 = vmatprep.subr.mxu0 0.0
    %759 = vmatpush1.msra.mxu0 0.0
    %760 = vmatprep.subr.mxu0 0.0
    %761 = vmatpush1.msra.mxu0 0.0
    %762 = vmatprep.subr.mxu0 0.0
    %763 = vmatpush1.msra.mxu0 0.0
    %764 = vmatprep.subr.mxu0 0.0
    %765 = vmatpush1.msra.mxu0 0.0
    %766 = vmatprep.subr.mxu0 0.0
    %767 = vmatpush1.msra.mxu0 0.0
    %768 = vmatprep.subr.mxu0 0.0
    %769 = vmatpush1.msra.mxu0 0.0
    %770 = vmatprep.subr.mxu0 0.0
    %771 = vmatpush1.msra.mxu0 0.0
    %772 = vmatprep.subr.mxu0 0.0
    %773 = vmatpush1.msra.mxu0 0.0
    %774 = vmatprep.subr.mxu0 0.0
    %775 = vmatpush1.msra.mxu0 0.0
    %776 = vmatprep.subr.mxu0 0.0
    %777 = vmatpush1.msra.mxu0 0.0
    %778 = vmatprep.subr.mxu0 0.0
    %779 = vmatpush1.msra.mxu0 0.0
    %780 = vmatprep.subr.mxu0 0.0
    %781 = vmatpush1.msra.mxu0 0.0
    %782 = vmatprep.subr.mxu0 0.0
    %783 = vmatpush1.msra.mxu0 0.0
    %784 = vmatprep.subr.mxu0 0.0
    %785 = vmatpush1.msra.mxu0 0.0
    %786 = vmatprep.subr.mxu0 0.0
    %787 = vmatpush1.msra.mxu0 0.0
    %788 = vmatprep.subr.mxu0 0.0
    %789 = vmatpush1.msra.mxu0 0.0
    %790 = vmatprep.subr.mxu0 0.0
    %791 = vmatpush1.msra.mxu0 0.0
    %792 = vmatprep.subr.mxu0 0.0
    %793 = vmatpush1.msra.mxu0 0.0
    %794 = vmatprep.subr.mxu0 0.0
    %795 = vmatpush1.msra.mxu0 0.0
    %796 = vmatprep.subr.mxu0 0.0
    %797 = vmatpush1.msra.mxu0 0.0
    %798 = vmatprep.subr.mxu0 0.0
    %799 = vmatpush1.msra.mxu0 0.0
    %800 = vmatprep.subr.mxu0 0.0
    %801 = vmatpush1.msra.mxu0 0.0
    %802 = vmatprep.subr.mxu0 0.0
    %803 = vmatpush1.msra.mxu0 0.0
    %804 = vmatprep.subr.mxu0 0.0
    %805 = vmatpush1.msra.mxu0 0.0
    %806 = vmatprep.subr.mxu0 0.0
    %807 = vmatpush1.msra.mxu0 0.0
    %808 = vmatprep.subr.mxu0 0.0
    %809 = vmatpush1.msra.mxu0 0.0
    %810 = vmatprep.subr.mxu0 0.0
    %811 = vmatpush1.msra.mxu0 0.0
    %812 = vmatprep.subr.mxu0 0.0
    %813 = vmatpush1.msra.mxu0 0.0
    %814 = vmatprep.mubr.f32.mxu0 0.0
    %815 = vmatmul.mubr.f32.gmra.mrb[0].mxu0 %v748
    %v816 = vpop.f32.mrb[0].mxu0
    %v817 = vadd.f32 0.0, %v816
    %v818 = vpop.f32.mrb[0].mxu0
    %819 = vdwg.mxu0
    %v820 = vrcp.pop %v664
    %v821 = vmul.f32 %v741, %v820
    %v822 = vrcp.pop %v667
    %v823 = vmul.f32 %v817, %v822
    %v825 = vsel %vm168, %v821, 0
    %v828 = vsel %vm168, %v823, 0
    %830 = vmatprep.subr.mxu0 0.0
    %831 = vmatpush1.msra.mxu0 %v164
    %832 = vmatprep.subr.mxu0 0.0
    %833 = vmatpush1.msra.mxu0 0.0
    %834 = vmatprep.subr.mxu0 0.0
    %835 = vmatpush1.msra.mxu0 0.0
    %836 = vmatprep.subr.mxu0 0.0
    %837 = vmatpush1.msra.mxu0 0.0
    %838 = vmatprep.subr.mxu0 0.0
    %839 = vmatpush1.msra.mxu0 0.0
    %840 = vmatprep.subr.mxu0 0.0
    %841 = vmatpush1.msra.mxu0 0.0
    %842 = vmatprep.subr.mxu0 0.0
    %843 = vmatpush1.msra.mxu0 0.0
    %844 = vmatprep.subr.mxu0 0.0
    %845 = vmatpush1.msra.mxu0 0.0
    %846 = vmatprep.subr.mxu0 0.0
    %847 = vmatpush1.msra.mxu0 0.0
    %848 = vmatprep.subr.mxu0 0.0
    %849 = vmatpush1.msra.mxu0 0.0
    %850 = vmatprep.subr.mxu0 0.0
    %851 = vmatpush1.msra.mxu0 0.0
    %852 = vmatprep.subr.mxu0 0.0
    %853 = vmatpush1.msra.mxu0 0.0
    %854 = vmatprep.subr.mxu0 0.0
    %855 = vmatpush1.msra.mxu0 0.0
    %856 = vmatprep.subr.mxu0 0.0
    %857 = vmatpush1.msra.mxu0 0.0
    %858 = vmatprep.subr.mxu0 0.0
    %859 = vmatpush1.msra.mxu0 0.0
    %860 = vmatprep.subr.mxu0 0.0
    %861 = vmatpush1.msra.mxu0 0.0
    %862 = vmatprep.subr.mxu0 0.0
    %863 = vmatpush1.msra.mxu0 0.0
    %864 = vmatprep.subr.mxu0 0.0
    %865 = vmatpush1.msra.mxu0 0.0
    %866 = vmatprep.subr.mxu0 0.0
    %867 = vmatpush1.msra.mxu0 0.0
    %868 = vmatprep.subr.mxu0 0.0
    %869 = vmatpush1.msra.mxu0 0.0
    %870 = vmatprep.subr.mxu0 0.0
    %871 = vmatpush1.msra.mxu0 0.0
    %872 = vmatprep.subr.mxu0 0.0
    %873 = vmatpush1.msra.mxu0 0.0
    %874 = vmatprep.subr.mxu0 0.0
    %875 = vmatpush1.msra.mxu0 0.0
    %876 = vmatprep.subr.mxu0 0.0
    %877 = vmatpush1.msra.mxu0 0.0
    %878 = vmatprep.subr.mxu0 0.0
    %879 = vmatpush1.msra.mxu0 0.0
    %880 = vmatprep.subr.mxu0 0.0
    %881 = vmatpush1.msra.mxu0 0.0
    %882 = vmatprep.subr.mxu0 0.0
    %883 = vmatpush1.msra.mxu0 0.0
    %884 = vmatprep.subr.mxu0 0.0
    %885 = vmatpush1.msra.mxu0 0.0
    %886 = vmatprep.subr.mxu0 0.0
    %887 = vmatpush1.msra.mxu0 0.0
    %888 = vmatprep.subr.mxu0 0.0
    %889 = vmatpush1.msra.mxu0 0.0
    %890 = vmatprep.subr.mxu0 0.0
    %891 = vmatpush1.msra.mxu0 0.0
    %892 = vmatprep.subr.mxu0 0.0
    %893 = vmatpush1.msra.mxu0 0.0
    %894 = vmatprep.mubr.f32.mxu0 0.0
    %895 = vmatmul.mubr.f32.gmra.mrb[0].mxu0 %v825
    %v896 = vpop.f32.mrb[0].mxu0
    %v897 = vadd.f32 0.0, %v896
    %v898 = vpop.f32.mrb[0].mxu0
    %899 = vmatprep.mubr.f32.mxu0 0.0
    %900 = vmatmul.mubr.f32.gmra.mrb[0].mxu0 %v828
    %v901 = vpop.f32.mrb[0].mxu0
    %v902 = vadd.f32 0.0, %v901
    %v903 = vpop.f32.mrb[0].mxu0
    %904 = vdwg.mxu0
    %v906 = vsel %vm168, %v491, 0
    %v909 = vsel %vm168, %v493, 0
    %911 = vmatprep.subr.mxu0 0.0
    %912 = vmatpush1.msra.mxu0 %v163
    %913 = vmatprep.subr.mxu0 0.0
    %914 = vmatpush1.msra.mxu0 0.0
    %915 = vmatprep.subr.mxu0 0.0
    %916 = vmatpush1.msra.mxu0 0.0
    %917 = vmatprep.subr.mxu0 0.0
    %918 = vmatpush1.msra.mxu0 0.0
    %919 = vmatprep.subr.mxu0 0.0
    %920 = vmatpush1.msra.mxu0 0.0
    %921 = vmatprep.subr.mxu0 0.0
    %922 = vmatpush1.msra.mxu0 0.0
    %923 = vmatprep.subr.mxu0 0.0
    %924 = vmatpush1.msra.mxu0 0.0
    %925 = vmatprep.subr.mxu0 0.0
    %926 = vmatpush1.msra.mxu0 0.0
    %927 = vmatprep.subr.mxu0 0.0
    %928 = vmatpush1.msra.mxu0 0.0
    %929 = vmatprep.subr.mxu0 0.0
    %930 = vmatpush1.msra.mxu0 0.0
    %931 = vmatprep.subr.mxu0 0.0
    %932 = vmatpush1.msra.mxu0 0.0
    %933 = vmatprep.subr.mxu0 0.0
    %934 = vmatpush1.msra.mxu0 0.0
    %935 = vmatprep.subr.mxu0 0.0
    %936 = vmatpush1.msra.mxu0 0.0
    %937 = vmatprep.subr.mxu0 0.0
    %938 = vmatpush1.msra.mxu0 0.0
    %939 = vmatprep.subr.mxu0 0.0
    %940 = vmatpush1.msra.mxu0 0.0
    %941 = vmatprep.subr.mxu0 0.0
    %942 = vmatpush1.msra.mxu0 0.0
    %943 = vmatprep.subr.mxu0 0.0
    %944 = vmatpush1.msra.mxu0 0.0
    %945 = vmatprep.subr.mxu0 0.0
    %946 = vmatpush1.msra.mxu0 0.0
    %947 = vmatprep.subr.mxu0 0.0
    %948 = vmatpush1.msra.mxu0 0.0
    %949 = vmatprep.subr.mxu0 0.0
    %950 = vmatpush1.msra.mxu0 0.0
    %951 = vmatprep.subr.mxu0 0.0
    %952 = vmatpush1.msra.mxu0 0.0
    %953 = vmatprep.subr.mxu0 0.0
    %954 = vmatpush1.msra.mxu0 0.0
    %955 = vmatprep.subr.mxu0 0.0
    %956 = vmatpush1.msra.mxu0 0.0
    %957 = vmatprep.subr.mxu0 0.0
    %958 = vmatpush1.msra.mxu0 0.0
    %959 = vmatprep.subr.mxu0 0.0
    %960 = vmatpush1.msra.mxu0 0.0
    %961 = vmatprep.subr.mxu0 0.0
    %962 = vmatpush1.msra.mxu0 0.0
    %963 = vmatprep.subr.mxu0 0.0
    %964 = vmatpush1.msra.mxu0 0.0
    %965 = vmatprep.subr.mxu0 0.0
    %966 = vmatpush1.msra.mxu0 0.0
    %967 = vmatprep.subr.mxu0 0.0
    %968 = vmatpush1.msra.mxu0 0.0
    %969 = vmatprep.subr.mxu0 0.0
    %970 = vmatpush1.msra.mxu0 0.0
    %971 = vmatprep.subr.mxu0 0.0
    %972 = vmatpush1.msra.mxu0 0.0
    %973 = vmatprep.subr.mxu0 0.0
    %974 = vmatpush1.msra.mxu0 0.0
    %975 = vmatprep.mubr.f32.mxu0 0.0
    %976 = vmatmul.mubr.f32.gmra.mrb[0].mxu0 %v906
    %v977 = vpop.f32.mrb[0].mxu0
    %v978 = vadd.f32 %v897, %v977
    %v979 = vpop.f32.mrb[0].mxu0
    %980 = vmatprep.mubr.f32.mxu0 0.0
    %981 = vmatmul.mubr.f32.gmra.mrb[0].mxu0 %v909
    %v982 = vpop.f32.mrb[0].mxu0
    %v983 = vadd.f32 %v902, %v982
    %v984 = vpop.f32.mrb[0].mxu0
    %985 = vdwg.mxu0
    %v986 = vld [vmem:[%s4] sm:$0x1]
    %v988 = vlaneseq
    %v989 = vshrl.u32 %v988, 7
    %v990 = vsub.s32 0, %v989
    %v991 = vrot.slane %v986, %v990
    %v993 = vadd.f32 %v978, %v991
    %v994 = vadd.f32 %v983, %v991
    %v995 = vadd.f32 %v68, %v993
    %v996 = vadd.f32 %v69, %v994
    %v997 = vsel %vm81, %v995, 0.0
    %998 = vadd.xlane.f32.xlu0 %v997
    %v999 = vpop.xlane.xlu0 %998
    %v1000 = vsel %vm81, %v996, 0.0
    %1001 = vadd.xlane.f32.xlu0 %v1000
    %v1002 = vpop.xlane.xlu0 %1001
    %v1003 = vrcp.pop 32.0
    %v1004 = vmul.f32 %v999, %v1003
    %v1005 = vmul.f32 %v1002, %v1003
    %v1006 = vsub.f32 %v995, %v1004
    %v1007 = vsub.f32 %v996, %v1005
    %v1008 = vmul.f32 %v1006, %v1006
    %v1009 = vmul.f32 %v1007, %v1007
    %v1010 = vsel %vm81, %v1008, 0.0
    %1011 = vadd.xlane.f32.xlu0 %v1010
    %v1012 = vpop.xlane.xlu0 %1011
    %v1013 = vsel %vm81, %v1009, 0.0
    %1014 = vadd.xlane.f32.xlu0 %v1013
    %v1015 = vpop.xlane.xlu0 %1014
    %v1016 = vmul.f32 %v1012, %v1003
    %v1017 = vmul.f32 %v1015, %v1003
    %v1018 = vadd.f32 %v1016, 1e-05
    %v1019 = vadd.f32 %v1017, 1e-05
    %v1020 = vrsqrt.pop %v1018
    %v1021 = vrsqrt.pop %v1019
    %v1022 = vmul.f32 %v1006, %v1020
    %v1023 = vmul.f32 %v1007, %v1021
    %v1024 = vld [vmem:[%s5] sm:$0x1]
    %v1026 = vlaneseq
    %v1027 = vshrl.u32 %v1026, 7
    %v1028 = vsub.s32 0, %v1027
    %v1029 = vrot.slane %v1024, %v1028
    %v1031 = vmul.f32 %v1022, %v1029
    %v1032 = vmul.f32 %v1023, %v1029
    %v1033 = vld [vmem:[%s6] sm:$0x1]
    %v1035 = vlaneseq
    %v1036 = vshrl.u32 %v1035, 7
    %v1037 = vsub.s32 0, %v1036
    %v1038 = vrot.slane %v1033, %v1037
    %v1040 = vadd.f32 %v1031, %v1038
    %v1041 = vadd.f32 %v1032, %v1038
    %1042 = vst.msk [vmem:[#allocation8] sm:$0xff] %vm81, %v1040
    %1043 = vst.msk [vmem:[#allocation8 + $0x8] sm:$0xff] %vm81, %v1041
    // Predicated region
    $region42: #{tpu_custom_call.1} parent=1 // pred_check
      _
    $region43: #{tpu_custom_call.1} parent=1 // pred_check_branch
      %1045 = sbr.rel (0) target = $region45
    $region44: #{tpu_custom_call.1} parent=1 // pred_region
      %s1047 = ssub.s32 256, 256
      %1048 = vsyncadd [#allocation4], %s1047
      %s1049 = sshll.u32 [#allocation8], 4
      %s1050 = int_to_ptr.vmem [resolvable:$true] %s1049
      %1055 = dma.vmem_to_hbm [thread:$0]  %s1050, 256, %s7, [#allocation4], 128, 128, 8
    $region45: #{tpu_custom_call.1} parent=1 // pred_fallthru
      _
    // Predicated region
    $region46: #{tpu_custom_call.1} parent=1 // pred_check
      _
    $region47: #{tpu_custom_call.1} parent=1 // pred_check_branch
      %1057 = sbr.rel (0) target = $region49
    $region48: #{tpu_custom_call.1} parent=1 // pred_region
      %1058 = dma.done [#allocation4], 256
    $region49: #{tpu_custom_call.1} parent=1 // pred_fallthru
      _
    %1059 = vsyncpa [#allocation3], 1
    %1060 = vsyncpa [#allocation6], 1
    %1061 = vsyncpa [#allocation4], 1

</llo_original>
